<compile_context>
chip_gen: v7x
topology: tpu7x:2x2x1
jax: 0.10.0
libtpu: 0.0.40
codegen_flags: <defaults>
</compile_context>

<pallas_src>
import functools

import jax
import jax.numpy as jnp
from jax.experimental import pallas as pl
from jax.experimental.pallas import tpu as pltpu

LANE = 128      # lane width (last-dim granule)
SUBLANE = 8     # sublane granule (second-to-last dim)
MAX_TILE_B = 4096   # keeps double-buffered activation tiles < ~6 MiB VMEM


def _round_up(n, m):
    return ((n + m - 1) // m) * m


def value_mlp_kernel(x_ref,
                     w1_ref, b1_ref,
                     w2_ref, b2_ref,
                     w3_ref, b3_ref,
                     wv_ref, bv_ref,
                     out_ref):
    """One batch tile of the fused 4-layer MLP.

    Matmul operands are bf16 (MXU native); accumulation, bias add and ReLU are
    done in f32 (keeps v5e elementwise on the f32 VPU path).  The final store
    is bf16 to halve output HBM/vst traffic.
    """
    x = x_ref[...]                                              # (TILE_B, 36) bf16

    h = jnp.dot(x, w1_ref[...], preferred_element_type=jnp.float32) + b1_ref[...]
    h = jnp.maximum(h, 0.0)

    h = jnp.dot(h.astype(jnp.bfloat16), w2_ref[...],
                preferred_element_type=jnp.float32) + b2_ref[...]
    h = jnp.maximum(h, 0.0)

    h = jnp.dot(h.astype(jnp.bfloat16), w3_ref[...],
                preferred_element_type=jnp.float32) + b3_ref[...]
    h = jnp.maximum(h, 0.0)

    v = jnp.dot(h.astype(jnp.bfloat16), wv_ref[...],
                preferred_element_type=jnp.float32) + bv_ref[...]
    out_ref[...] = v.astype(out_ref.dtype)                      # (TILE_B, 128) bf16


def _pick_tile_b(B):
    """Batch tile: single grid step for B <= 512, else 512-row tiles.

    (Grid counts for large B are then even multiples whenever B is a multiple
    of 1024, which keeps both v7x TensorCores fed via the 'parallel' axis; on
    v5e/v6e single-TC chips the choice is a no-op.)
    """
    if B <= 512:
        return _round_up(B, SUBLANE)
    return 512


@functools.partial(jax.jit, static_argnames=("n_action", "tile_b"))
def value_module_forward(x, padded_params, n_action, tile_b=None):
    """x: (B, feature_extractor) f32.  padded_params: output of pad_and_cast_params.

    Returns (B, n_action) f32, matching the PyTorch forward.
    """
    B, F = x.shape
    p = padded_params
    assert p["w1"].shape[0] == F, (p["w1"].shape, F)
    H_PAD = p["w1"].shape[1]
    A_PAD = p["wv"].shape[1]

    if tile_b is None:
        tile_b = _pick_tile_b(B)
    tile_b = max(SUBLANE, min(tile_b, MAX_TILE_B))
    assert tile_b % SUBLANE == 0, tile_b
    B_PAD = _round_up(B, tile_b)

    # Only the batch axis is padded; feature axis stays at F (=36).  A single
    # jnp.pad fuses under jit (no alloc + dynamic-update-slice round trip).
    xb = jnp.pad(x.astype(jnp.bfloat16), ((0, B_PAD - B), (0, 0)))

    grid = (B_PAD // tile_b,)

    x_spec = pl.BlockSpec((tile_b, F), lambda i: (i, 0))
    out_spec = pl.BlockSpec((tile_b, A_PAD), lambda i: (i, 0))

    def resident(shape):
        # Constant block index -> weight/bias stays VMEM-resident across steps.
        return pl.BlockSpec(shape, lambda i: (0, 0))

    args = (xb,
            p["w1"], p["b1"],
            p["w2"], p["b2"],
            p["w3"], p["b3"],
            p["wv"], p["bv"])

    flops = 2 * B_PAD * (F * H_PAD + 2 * H_PAD * H_PAD + H_PAD * A_PAD)
    bytes_accessed = (sum(int(a.size) * a.dtype.itemsize for a in args)
                      + B_PAD * A_PAD * 2)

    out = pl.pallas_call(
        value_mlp_kernel,
        out_shape=jax.ShapeDtypeStruct((B_PAD, A_PAD), jnp.bfloat16),
        grid=grid,
        in_specs=[x_spec,
                  resident(p["w1"].shape), resident(p["b1"].shape),
                  resident(p["w2"].shape), resident(p["b2"].shape),
                  resident(p["w3"].shape), resident(p["b3"].shape),
                  resident(p["wv"].shape), resident(p["bv"].shape)],
        out_specs=out_spec,
        compiler_params=pltpu.CompilerParams(
            dimension_semantics=("parallel",)),
        cost_estimate=pl.CostEstimate(flops=flops,
                                      transcendentals=0,
                                      bytes_accessed=bytes_accessed),
    )(*args)

    # Slice padding back off (rows beyond B, lanes beyond n_action); cast to
    # the module's f32 output dtype.  Both fuse with the caller's graph.
    return out[:B, :n_action].astype(jnp.float32)


def init_params(key, feature_extractor, last_hidden, n_action):
    """PyTorch-Linear-style init (uniform +-1/sqrt(fan_in)), weights stored (in, out)."""
    def linear(k, fan_in, fan_out):
        kw, kb = jax.random.split(k)
        bound = 1.0 / jnp.sqrt(jnp.float32(fan_in))
        w = jax.random.uniform(kw, (fan_in, fan_out), jnp.float32, -bound, bound)
        b = jax.random.uniform(kb, (1, fan_out), jnp.float32, -bound, bound)
        return w, b

    k1, k2, k3, k4 = jax.random.split(key, 4)
    w1, b1 = linear(k1, feature_extractor, last_hidden)
    w2, b2 = linear(k2, last_hidden, last_hidden)
    w3, b3 = linear(k3, last_hidden, last_hidden)
    wv, bv = linear(k4, last_hidden, n_action)
    return {"w1": w1, "b1": b1, "w2": w2, "b2": b2,
            "w3": w3, "b3": b3, "wv": wv, "bv": bv}


def pad_and_cast_params(params):
    """Zero-pad fan_out axes up to a multiple of 128 (done once, outside the
    kernel) and cast matmul weights to bf16.  w1's fan_in stays UNPADDED (the
    kernel consumes x with its true feature width); hidden fan_in axes are
    padded to match the padded fan_out of the previous layer.  Biases stay f32
    (elementwise path).  Zero padding is exact for Linear+ReLU stacks."""
    def pad_w(w, pad_fan_in):
        fi, fo = w.shape
        fi_p = _round_up(fi, LANE) if pad_fan_in else fi
        out = jnp.zeros((fi_p, _round_up(fo, LANE)), jnp.bfloat16)
        return out.at[:fi, :fo].set(w.astype(jnp.bfloat16))

    def pad_b(b):
        fo = b.shape[1]
        out = jnp.zeros((1, _round_up(fo, LANE)), jnp.float32)
        return out.at[:, :fo].set(b)

    return {"w1": pad_w(params["w1"], pad_fan_in=False), "b1": pad_b(params["b1"]),
            "w2": pad_w(params["w2"], pad_fan_in=True),  "b2": pad_b(params["b2"]),
            "w3": pad_w(params["w3"], pad_fan_in=True),  "b3": pad_b(params["b3"]),
            "wv": pad_w(params["wv"], pad_fan_in=True),  "bv": pad_b(params["bv"])}


def reference_forward(x, p):
    """Pure-JAX reference mirroring the kernel's bf16-operand / f32-accumulate math."""
    bf = jnp.bfloat16

    def lin(h, w, b):
        return jnp.dot(h.astype(bf), w.astype(bf),
                       preferred_element_type=jnp.float32) + b

    h = jnp.maximum(lin(x, p["w1"], p["b1"]), 0.0)
    h = jnp.maximum(lin(h, p["w2"], p["b2"]), 0.0)
    h = jnp.maximum(lin(h, p["w3"], p["b3"]), 0.0)
    return lin(h, p["wv"], p["bv"])


if __name__ == "__main__":
    # Sizes consistent with the module's __init__:
    #   n_hidden=32, n_rnn_layers=1, rnn_directions=1,
    #   n_handcrafted_features=4, use_handcraft=1, n_action=2
    n_hidden = 32
    n_rnn_layers = 1
    rnn_directions = 1
    n_handcrafted_features = 4
    use_handcraft = 1
    n_action = 2

    feature_extractor = (n_hidden * n_rnn_layers * rnn_directions
                         + n_handcrafted_features * use_handcraft)   # 36
    last_hidden = feature_extractor * 2                              # 72
    batch = 256          # <= 512 -> single grid step (tile_b = 256)

    key = jax.random.PRNGKey(0)
    k_params, k_x = jax.random.split(key)
    params = init_params(k_params, feature_extractor, last_hidden, n_action)
    padded = pad_and_cast_params(params)
    x = jax.random.normal(k_x, (batch, feature_extractor), jnp.float32)

    out = value_module_forward(x, padded, n_action)
    out = jax.block_until_ready(out)

    ref = reference_forward(x, params)
    assert out.shape == (batch, n_action), out.shape
    # bf16 output store adds ~3 decimal digits of rounding; values are O(1).
    assert jnp.allclose(out, ref, atol=2e-2, rtol=2e-2), "mismatch vs reference"

    print("KERNEL_OK")
</pallas_src>

<mosaic_0001>
module attributes {stable_mosaic.version = 11 : i64} {
  func.func @value_mlp_kernel(%arg0: i32, %arg1: memref<256x36xbf16, #tpu.memory_space<vmem>>, %arg2: memref<36x128xbf16, #tpu.memory_space<vmem>>, %arg3: memref<1x128xf32, #tpu.memory_space<vmem>>, %arg4: memref<128x128xbf16, #tpu.memory_space<vmem>>, %arg5: memref<1x128xf32, #tpu.memory_space<vmem>>, %arg6: memref<128x128xbf16, #tpu.memory_space<vmem>>, %arg7: memref<1x128xf32, #tpu.memory_space<vmem>>, %arg8: memref<128x128xbf16, #tpu.memory_space<vmem>>, %arg9: memref<1x128xf32, #tpu.memory_space<vmem>>, %arg10: memref<256x128xbf16, #tpu.memory_space<vmem>>) attributes {dimension_semantics = [#tpu.dimension_semantics<parallel>], iteration_bounds = array<i64: 1>, scalar_prefetch = 0 : i64, scratch_operands = 0 : i64, tpu.core_type = #tpu.core_type<tc>, window_params = [{transform_indices = @transform_0, window_bounds = array<i64: 256, 36>}, {pipeline_mode = #tpu.pipeline_mode<synchronous>, transform_indices = @transform_1, window_bounds = array<i64: 36, 128>}, {pipeline_mode = #tpu.pipeline_mode<synchronous>, transform_indices = @transform_2, window_bounds = array<i64: 1, 128>}, {pipeline_mode = #tpu.pipeline_mode<synchronous>, transform_indices = @transform_3, window_bounds = array<i64: 128, 128>}, {pipeline_mode = #tpu.pipeline_mode<synchronous>, transform_indices = @transform_4, window_bounds = array<i64: 1, 128>}, {pipeline_mode = #tpu.pipeline_mode<synchronous>, transform_indices = @transform_5, window_bounds = array<i64: 128, 128>}, {pipeline_mode = #tpu.pipeline_mode<synchronous>, transform_indices = @transform_6, window_bounds = array<i64: 1, 128>}, {pipeline_mode = #tpu.pipeline_mode<synchronous>, transform_indices = @transform_7, window_bounds = array<i64: 128, 128>}, {pipeline_mode = #tpu.pipeline_mode<synchronous>, transform_indices = @transform_8, window_bounds = array<i64: 1, 128>}, {transform_indices = @transform_9, window_bounds = array<i64: 256, 128>}]} {
    %c0 = arith.constant 0 : index
    %c0_0 = arith.constant 0 : index
    %0 = vector.load %arg1[%c0, %c0_0] : memref<256x36xbf16, #tpu.memory_space<vmem>>, vector<256x36xbf16>
    %c0_1 = arith.constant 0 : index
    %c0_2 = arith.constant 0 : index
    %1 = vector.load %arg2[%c0_1, %c0_2] : memref<36x128xbf16, #tpu.memory_space<vmem>>, vector<36x128xbf16>
    %cst = arith.constant dense<0.000000e+00> : vector<256x128xf32>
    %2 = tpu.matmul %0, %1, %cst {dimension_numbers = #tpu.dot_dimension_numbers<[1], [0], [0], [1], [0, 0, 1, 1], [], []>} : vector<256x36xbf16>, vector<36x128xbf16>, vector<256x128xf32> -> vector<256x128xf32>
    %c0_3 = arith.constant 0 : index
    %c0_4 = arith.constant 0 : index
    %3 = vector.load %arg3[%c0_3, %c0_4] : memref<1x128xf32, #tpu.memory_space<vmem>>, vector<1x128xf32>
    %4 = vector.broadcast %3 : vector<1x128xf32> to vector<256x128xf32>
    %5 = arith.addf %2, %4 : vector<256x128xf32>
    %cst_5 = arith.constant 0.000000e+00 : f32
    %6 = vector.broadcast %cst_5 : f32 to vector<256x128xf32>
    %7 = arith.maximumf %5, %6 : vector<256x128xf32>
    %8 = arith.truncf %7 : vector<256x128xf32> to vector<256x128xbf16>
    %c0_6 = arith.constant 0 : index
    %c0_7 = arith.constant 0 : index
    %9 = vector.load %arg4[%c0_6, %c0_7] : memref<128x128xbf16, #tpu.memory_space<vmem>>, vector<128x128xbf16>
    %cst_8 = arith.constant dense<0.000000e+00> : vector<256x128xf32>
    %10 = tpu.matmul %8, %9, %cst_8 {dimension_numbers = #tpu.dot_dimension_numbers<[1], [0], [0], [1], [0, 0, 1, 1], [], []>} : vector<256x128xbf16>, vector<128x128xbf16>, vector<256x128xf32> -> vector<256x128xf32>
    %c0_9 = arith.constant 0 : index
    %c0_10 = arith.constant 0 : index
    %11 = vector.load %arg5[%c0_9, %c0_10] : memref<1x128xf32, #tpu.memory_space<vmem>>, vector<1x128xf32>
    %12 = vector.broadcast %11 : vector<1x128xf32> to vector<256x128xf32>
    %13 = arith.addf %10, %12 : vector<256x128xf32>
    %cst_11 = arith.constant 0.000000e+00 : f32
    %14 = vector.broadcast %cst_11 : f32 to vector<256x128xf32>
    %15 = arith.maximumf %13, %14 : vector<256x128xf32>
    %16 = arith.truncf %15 : vector<256x128xf32> to vector<256x128xbf16>
    %c0_12 = arith.constant 0 : index
    %c0_13 = arith.constant 0 : index
    %17 = vector.load %arg6[%c0_12, %c0_13] : memref<128x128xbf16, #tpu.memory_space<vmem>>, vector<128x128xbf16>
    %cst_14 = arith.constant dense<0.000000e+00> : vector<256x128xf32>
    %18 = tpu.matmul %16, %17, %cst_14 {dimension_numbers = #tpu.dot_dimension_numbers<[1], [0], [0], [1], [0, 0, 1, 1], [], []>} : vector<256x128xbf16>, vector<128x128xbf16>, vector<256x128xf32> -> vector<256x128xf32>
    %c0_15 = arith.constant 0 : index
    %c0_16 = arith.constant 0 : index
    %19 = vector.load %arg7[%c0_15, %c0_16] : memref<1x128xf32, #tpu.memory_space<vmem>>, vector<1x128xf32>
    %20 = vector.broadcast %19 : vector<1x128xf32> to vector<256x128xf32>
    %21 = arith.addf %18, %20 : vector<256x128xf32>
    %cst_17 = arith.constant 0.000000e+00 : f32
    %22 = vector.broadcast %cst_17 : f32 to vector<256x128xf32>
    %23 = arith.maximumf %21, %22 : vector<256x128xf32>
    %24 = arith.truncf %23 : vector<256x128xf32> to vector<256x128xbf16>
    %c0_18 = arith.constant 0 : index
    %c0_19 = arith.constant 0 : index
    %25 = vector.load %arg8[%c0_18, %c0_19] : memref<128x128xbf16, #tpu.memory_space<vmem>>, vector<128x128xbf16>
    %cst_20 = arith.constant dense<0.000000e+00> : vector<256x128xf32>
    %26 = tpu.matmul %24, %25, %cst_20 {dimension_numbers = #tpu.dot_dimension_numbers<[1], [0], [0], [1], [0, 0, 1, 1], [], []>} : vector<256x128xbf16>, vector<128x128xbf16>, vector<256x128xf32> -> vector<256x128xf32>
    %c0_21 = arith.constant 0 : index
    %c0_22 = arith.constant 0 : index
    %27 = vector.load %arg9[%c0_21, %c0_22] : memref<1x128xf32, #tpu.memory_space<vmem>>, vector<1x128xf32>
    %28 = vector.broadcast %27 : vector<1x128xf32> to vector<256x128xf32>
    %29 = arith.addf %26, %28 : vector<256x128xf32>
    %30 = arith.truncf %29 : vector<256x128xf32> to vector<256x128xbf16>
    %c0_23 = arith.constant 0 : index
    %c0_24 = arith.constant 0 : index
    %31 = vector.load %arg10[%c0_23, %c0_24] : memref<256x128xbf16, #tpu.memory_space<vmem>>, vector<256x128xbf16>
    tpu.vector_store %arg10[%c0_23, %c0_24], %30 {strides = array<i32>} : memref<256x128xbf16, #tpu.memory_space<vmem>>, vector<256x128xbf16>,
    return
  }
  func.func @transform_0(%arg0: i32) -> (i32, i32) {
    %c0_i32 = arith.constant 0 : i32
    %c0_i32_0 = arith.constant 0 : i32
    return %arg0, %c0_i32 : i32, i32
  }
  func.func @transform_1(%arg0: i32) -> (i32, i32) {
    %c0_i32 = arith.constant 0 : i32
    %c0_i32_0 = arith.constant 0 : i32
    %c0_i32_1 = arith.constant 0 : i32
    return %c0_i32, %c0_i32_0 : i32, i32
  }
  func.func @transform_2(%arg0: i32) -> (i32, i32) {
    %c0_i32 = arith.constant 0 : i32
    %c0_i32_0 = arith.constant 0 : i32
    %c0_i32_1 = arith.constant 0 : i32
    return %c0_i32, %c0_i32_0 : i32, i32
  }
  func.func @transform_3(%arg0: i32) -> (i32, i32) {
    %c0_i32 = arith.constant 0 : i32
    %c0_i32_0 = arith.constant 0 : i32
    %c0_i32_1 = arith.constant 0 : i32
    return %c0_i32, %c0_i32_0 : i32, i32
  }
  func.func @transform_4(%arg0: i32) -> (i32, i32) {
    %c0_i32 = arith.constant 0 : i32
    %c0_i32_0 = arith.constant 0 : i32
    %c0_i32_1 = arith.constant 0 : i32
    return %c0_i32, %c0_i32_0 : i32, i32
  }
  func.func @transform_5(%arg0: i32) -> (i32, i32) {
    %c0_i32 = arith.constant 0 : i32
    %c0_i32_0 = arith.constant 0 : i32
    %c0_i32_1 = arith.constant 0 : i32
    return %c0_i32, %c0_i32_0 : i32, i32
  }
  func.func @transform_6(%arg0: i32) -> (i32, i32) {
    %c0_i32 = arith.constant 0 : i32
    %c0_i32_0 = arith.constant 0 : i32
    %c0_i32_1 = arith.constant 0 : i32
    return %c0_i32, %c0_i32_0 : i32, i32
  }
  func.func @transform_7(%arg0: i32) -> (i32, i32) {
    %c0_i32 = arith.constant 0 : i32
    %c0_i32_0 = arith.constant 0 : i32
    %c0_i32_1 = arith.constant 0 : i32
    return %c0_i32, %c0_i32_0 : i32, i32
  }
  func.func @transform_8(%arg0: i32) -> (i32, i32) {
    %c0_i32 = arith.constant 0 : i32
    %c0_i32_0 = arith.constant 0 : i32
    %c0_i32_1 = arith.constant 0 : i32
    return %c0_i32, %c0_i32_0 : i32, i32
  }
  func.func @transform_9(%arg0: i32) -> (i32, i32) {
    %c0_i32 = arith.constant 0 : i32
    %c0_i32_0 = arith.constant 0 : i32
    return %arg0, %c0_i32 : i32, i32
  }
}

</mosaic_0001>

<llo_original>
// kernel: value_module_forward.1
$region0: #{value_module_forward.1}
  #allocation0 [shape = 'u32[]', space=smem, size = 0x4, offset = 0x4, fixed_abs, tag = 'smem constant byte address 0x4 - core index']
  #allocation1 [shape = 'u32[144,128]{1,0:T(1,128)}', space=vmem, size = 0x12000, scoped, tag = 'internal scratch']
  %s0 = inlined_call_operand.vmem [shape: bf16[256,36], index: 0, kind: input, shape index: {}]
  %s1 = inlined_call_operand.vmem [shape: bf16[36,128], index: 1, kind: input, shape index: {}]
  %s2 = inlined_call_operand.vmem [shape: f32[1,128], index: 2, kind: input, shape index: {}]
  %s3 = inlined_call_operand.vmem [shape: bf16[128,128], index: 3, kind: input, shape index: {}]
  %s4 = inlined_call_operand.vmem [shape: f32[1,128], index: 4, kind: input, shape index: {}]
  %s5 = inlined_call_operand.vmem [shape: bf16[128,128], index: 5, kind: input, shape index: {}]
  %s6 = inlined_call_operand.vmem [shape: f32[1,128], index: 6, kind: input, shape index: {}]
  %s7 = inlined_call_operand.vmem [shape: bf16[128,128], index: 7, kind: input, shape index: {}]
  %s8 = inlined_call_operand.vmem [shape: f32[1,128], index: 8, kind: input, shape index: {}]
  %s9 = inlined_call_operand.vmem [shape: bf16[256,128], index: 9, kind: output, shape index: {}]
  %s10 = sld [smem:[#allocation0]]
  $region46: #{value_module_forward.1} parent=0
    _
  %s12 = ssub.s32 1, %s10
  %s13 = scalar_select 0, %s12, %s10
  // Predicated region
  $region2: #{value_module_forward.1} parent=0 // pred_check
    _
  $region3: #{value_module_forward.1} parent=0 // pred_check_branch
    %15 = sbr.rel (0) target = $region5
  $region4: #{value_module_forward.1} parent=0 // pred_region
    _
  $region5: #{value_module_forward.1} parent=0 // pred_fallthru
    _
  // Predicated region
  $region6: #{value_module_forward.1} parent=0 // pred_check
    _
  $region7: #{value_module_forward.1} parent=0 // pred_check_branch
    %17 = sbr.rel (0) target = $region9
  $region8: #{value_module_forward.1} parent=0 // pred_region
    _
  $region9: #{value_module_forward.1} parent=0 // pred_fallthru
    _
  // Predicated region
  $region10: #{value_module_forward.1} parent=0 // pred_check
    _
  $region11: #{value_module_forward.1} parent=0 // pred_check_branch
    %19 = sbr.rel (0) target = $region13
  $region12: #{value_module_forward.1} parent=0 // pred_region
    _
  $region13: #{value_module_forward.1} parent=0 // pred_fallthru
    _
  // Predicated region
  $region14: #{value_module_forward.1} parent=0 // pred_check
    _
  $region15: #{value_module_forward.1} parent=0 // pred_check_branch
    %21 = sbr.rel (0) target = $region17
  $region16: #{value_module_forward.1} parent=0 // pred_region
    _
  $region17: #{value_module_forward.1} parent=0 // pred_fallthru
    _
  // Predicated region
  $region18: #{value_module_forward.1} parent=0 // pred_check
    _
  $region19: #{value_module_forward.1} parent=0 // pred_check_branch
    %23 = sbr.rel (0) target = $region21
  $region20: #{value_module_forward.1} parent=0 // pred_region
    _
  $region21: #{value_module_forward.1} parent=0 // pred_fallthru
    _
  // Predicated region
  $region22: #{value_module_forward.1} parent=0 // pred_check
    _
  $region23: #{value_module_forward.1} parent=0 // pred_check_branch
    %25 = sbr.rel (0) target = $region25
  $region24: #{value_module_forward.1} parent=0 // pred_region
    _
  $region25: #{value_module_forward.1} parent=0 // pred_fallthru
    _
  // Predicated region
  $region26: #{value_module_forward.1} parent=0 // pred_check
    _
  $region27: #{value_module_forward.1} parent=0 // pred_check_branch
    %27 = sbr.rel (0) target = $region29
  $region28: #{value_module_forward.1} parent=0 // pred_region
    _
  $region29: #{value_module_forward.1} parent=0 // pred_fallthru
    _
  // Predicated region
  $region30: #{value_module_forward.1} parent=0 // pred_check
    _
  $region31: #{value_module_forward.1} parent=0 // pred_check_branch
    %29 = sbr.rel (0) target = $region33
  $region32: #{value_module_forward.1} parent=0 // pred_region
    _
  $region33: #{value_module_forward.1} parent=0 // pred_fallthru
    _
  // Predicated region
  $region34: #{value_module_forward.1} parent=0 // pred_check
    _
  $region35: #{value_module_forward.1} parent=0 // pred_check_branch
    %31 = sbr.rel (0) target = $region37
  $region36: #{value_module_forward.1} parent=0 // pred_region
    _
  $region37: #{value_module_forward.1} parent=0 // pred_fallthru
    _
  %v33 = vld [vmem:[%s0] sm:$0xf]
  %v34 = vld [vmem:[%s0 + $0x4] sm:$0xf]
  %v35 = vld [vmem:[%s0 + $0x8] sm:$0xf]
  %v36 = vld [vmem:[%s0 + $0xc] sm:$0xf]
  %v37 = vld [vmem:[%s0 + $0x10] sm:$0xf]
  %v38 = vld [vmem:[%s0 + $0x14] sm:$0xf]
  %v39 = vld [vmem:[%s0 + $0x18] sm:$0xf]
  %v40 = vld [vmem:[%s0 + $0x1c] sm:$0xf]
  %v41 = vld [vmem:[%s0 + $0x20] sm:$0xf]
  %v42 = vld [vmem:[%s0 + $0x24] sm:$0xf]
  %v43 = vld [vmem:[%s0 + $0x28] sm:$0xf]
  %v44 = vld [vmem:[%s0 + $0x2c] sm:$0xf]
  %v45 = vld [vmem:[%s0 + $0x30] sm:$0xf]
  %v46 = vld [vmem:[%s0 + $0x34] sm:$0xf]
  %v47 = vld [vmem:[%s0 + $0x38] sm:$0xf]
  %v48 = vld [vmem:[%s0 + $0x3c] sm:$0xf]
  %v49 = vld [vmem:[%s0 + $0x40] sm:$0xf]
  %v50 = vld [vmem:[%s0 + $0x44] sm:$0xf]
  %v51 = vld [vmem:[%s0 + $0x48] sm:$0xf]
  %v52 = vld [vmem:[%s0 + $0x4c] sm:$0xf]
  %v53 = vld [vmem:[%s0 + $0x50] sm:$0xf]
  %v54 = vld [vmem:[%s0 + $0x54] sm:$0xf]
  %v55 = vld [vmem:[%s0 + $0x58] sm:$0xf]
  %v56 = vld [vmem:[%s0 + $0x5c] sm:$0xf]
  %v57 = vld [vmem:[%s0 + $0x60] sm:$0xf]
  %v58 = vld [vmem:[%s0 + $0x64] sm:$0xf]
  %v59 = vld [vmem:[%s0 + $0x68] sm:$0xf]
  %v60 = vld [vmem:[%s0 + $0x6c] sm:$0xf]
  %v61 = vld [vmem:[%s0 + $0x70] sm:$0xf]
  %v62 = vld [vmem:[%s0 + $0x74] sm:$0xf]
  %v63 = vld [vmem:[%s0 + $0x78] sm:$0xf]
  %v64 = vld [vmem:[%s0 + $0x7c] sm:$0xf]
  %v65 = vld [vmem:[%s1] sm:$0xf]
  %v66 = vld [vmem:[%s1 + $0x4] sm:$0xf]
  %v67 = vld [vmem:[%s1 + $0x8] sm:$0xf]
  %v68 = vld [vmem:[%s1 + $0xc] sm:$0xf]
  %v69 = vld [vmem:[%s1 + $0x10] sm:$0x3]
  %v70 = vld [vmem:[%s2] sm:$0x1]
  %v72 = vlaneseq
  %v73 = vshrl.u32 %v72, 7
  %v74 = vsub.s32 0, %v73
  %v75 = vrot.slane %v70, %v74
  %v109 = vunpack.c.l.b16 %v33
  %v110 = vunpack.c.l.b16 %v34
  %v111 = vunpack.c.l.b16 %v35
  %v112 = vunpack.c.l.b16 %v36
  %v113 = vunpack.c.l.b16 %v37
  %v114 = vunpack.c.l.b16 %v38
  %v115 = vunpack.c.l.b16 %v39
  %v116 = vunpack.c.l.b16 %v40
  %v117 = vunpack.c.l.b16 %v41
  %v118 = vunpack.c.l.b16 %v42
  %v119 = vunpack.c.l.b16 %v43
  %v120 = vunpack.c.l.b16 %v44
  %v121 = vunpack.c.l.b16 %v45
  %v122 = vunpack.c.l.b16 %v46
  %v123 = vunpack.c.l.b16 %v47
  %v124 = vunpack.c.l.b16 %v48
  %v125 = vunpack.c.l.b16 %v49
  %v126 = vunpack.c.l.b16 %v50
  %v127 = vunpack.c.l.b16 %v51
  %v128 = vunpack.c.l.b16 %v52
  %v129 = vunpack.c.l.b16 %v53
  %v130 = vunpack.c.l.b16 %v54
  %v131 = vunpack.c.l.b16 %v55
  %v132 = vunpack.c.l.b16 %v56
  %v133 = vunpack.c.l.b16 %v57
  %v134 = vunpack.c.l.b16 %v58
  %v135 = vunpack.c.l.b16 %v59
  %v136 = vunpack.c.l.b16 %v60
  %v137 = vunpack.c.l.b16 %v61
  %v138 = vunpack.c.l.b16 %v62
  %v139 = vunpack.c.l.b16 %v63
  %v140 = vunpack.c.l.b16 %v64
  %v141 = vpack.c.b16 %v110, %v109
  %v142 = vpack.c.b16 %v112, %v111
  %v143 = vpack.c.b16 %v114, %v113
  %v144 = vpack.c.b16 %v116, %v115
  %v145 = vpack.c.b16 %v118, %v117
  %v146 = vpack.c.b16 %v120, %v119
  %v147 = vpack.c.b16 %v122, %v121
  %v148 = vpack.c.b16 %v124, %v123
  %v149 = vpack.c.b16 %v126, %v125
  %v150 = vpack.c.b16 %v128, %v127
  %v151 = vpack.c.b16 %v130, %v129
  %v152 = vpack.c.b16 %v132, %v131
  %v153 = vpack.c.b16 %v134, %v133
  %v154 = vpack.c.b16 %v136, %v135
  %v155 = vpack.c.b16 %v138, %v137
  %v156 = vpack.c.b16 %v140, %v139
  %v162 = vunpack.c.l.b16 %v65
  %v163 = vunpack.c.l.b16 %v66
  %v164 = vunpack.c.l.b16 %v67
  %v165 = vunpack.c.l.b16 %v68
  %v166 = vunpack.c.l.b16 %v69
  %v167 = vpack.c.b16 %v163, %v162
  %v168 = vpack.c.b16 %v165, %v164
  %v169 = vpack.c.b16 %v166, %v166
  %vm172 = vcmask 293888
  %v174 = vsel %vm172, %v141, 0
  %v177 = vsel %vm172, %v142, 0
  %v180 = vsel %vm172, %v143, 0
  %v183 = vsel %vm172, %v144, 0
  %v186 = vsel %vm172, %v145, 0
  %v189 = vsel %vm172, %v146, 0
  %v192 = vsel %vm172, %v147, 0
  %v195 = vsel %vm172, %v148, 0
  %v198 = vsel %vm172, %v149, 0
  %v201 = vsel %vm172, %v150, 0
  %v204 = vsel %vm172, %v151, 0
  %v207 = vsel %vm172, %v152, 0
  %v210 = vsel %vm172, %v153, 0
  %v213 = vsel %vm172, %v154, 0
  %v216 = vsel %vm172, %v155, 0
  %v219 = vsel %vm172, %v156, 0
  %vm221 = vcmask 1041408
  %v223 = vsel %vm221, %v169, 0
  %225 = vmatprep.subr.bf16.mxu0 0
  %226 = vmatpush1.bf16.msra.mxu0 %v167
  %227 = vmatprep.subr.bf16.mxu0 0
  %228 = vmatpush1.bf16.msra.mxu0 %v168
  %229 = vmatprep.subr.bf16.mxu0 0
  %230 = vmatpush1.bf16.msra.mxu0 %v223
  %231 = vmatprep.subr.bf16.mxu0 0
  %232 = vmatpush1.bf16.msra.mxu0 0
  %233 = vmatprep.subr.bf16.mxu0 0
  %234 = vmatpush1.bf16.msra.mxu0 0
  %235 = vmatprep.subr.bf16.mxu0 0
  %236 = vmatpush1.bf16.msra.mxu0 0
  %237 = vmatprep.subr.bf16.mxu0 0
  %238 = vmatpush1.bf16.msra.mxu0 0
  %239 = vmatprep.subr.bf16.mxu0 0
  %240 = vmatpush1.bf16.msra.mxu0 0
  %241 = vmatprep.subr.bf16.mxu0 0
  %242 = vmatpush1.bf16.msra.mxu0 0
  %243 = vmatprep.subr.bf16.mxu0 0
  %244 = vmatpush1.bf16.msra.mxu0 0
  %245 = vmatprep.subr.bf16.mxu0 0
  %246 = vmatpush1.bf16.msra.mxu0 0
  %247 = vmatprep.subr.bf16.mxu0 0
  %248 = vmatpush1.bf16.msra.mxu0 0
  %249 = vmatprep.subr.bf16.mxu0 0
  %250 = vmatpush1.bf16.msra.mxu0 0
  %251 = vmatprep.subr.bf16.mxu0 0
  %252 = vmatpush1.bf16.msra.mxu0 0
  %253 = vmatprep.subr.bf16.mxu0 0
  %254 = vmatpush1.bf16.msra.mxu0 0
  %255 = vmatprep.subr.bf16.mxu0 0
  %256 = vmatpush1.bf16.msra.mxu0 0
  %257 = vmatprep.mubr.bf16.mxu0 0
  %258 = vmatmul.mubr.bf16.gmra.mrb[0].mxu0 %v174
  %v259 = vpop.f32.mrb[0].mxu0
  %v260 = vadd.f32 %v75, %v259
  %v261 = vpop.f32.mrb[0].mxu0
  %v262 = vpop.f32.mrb[0].mxu0
  %v263 = vadd.f32 %v75, %v262
  %v264 = vpop.f32.mrb[0].mxu0
  %265 = vmatprep.mubr.bf16.mxu0 0
  %266 = vmatmul.mubr.bf16.gmra.mrb[0].mxu0 %v177
  %v267 = vpop.f32.mrb[0].mxu0
  %v268 = vadd.f32 %v75, %v267
  %v269 = vpop.f32.mrb[0].mxu0
  %v270 = vpop.f32.mrb[0].mxu0
  %v271 = vadd.f32 %v75, %v270
  %v272 = vpop.f32.mrb[0].mxu0
  %273 = vmatprep.mubr.bf16.mxu0 0
  %274 = vmatmul.mubr.bf16.gmra.mrb[0].mxu0 %v180
  %v275 = vpop.f32.mrb[0].mxu0
  %v276 = vadd.f32 %v75, %v275
  %v277 = vpop.f32.mrb[0].mxu0
  %v278 = vpop.f32.mrb[0].mxu0
  %v279 = vadd.f32 %v75, %v278
  %v280 = vpop.f32.mrb[0].mxu0
  %281 = vmatprep.mubr.bf16.mxu0 0
  %282 = vmatmul.mubr.bf16.gmra.mrb[0].mxu0 %v183
  %v283 = vpop.f32.mrb[0].mxu0
  %v284 = vadd.f32 %v75, %v283
  %v285 = vpop.f32.mrb[0].mxu0
  %v286 = vpop.f32.mrb[0].mxu0
  %v287 = vadd.f32 %v75, %v286
  %v288 = vpop.f32.mrb[0].mxu0
  %289 = vmatprep.mubr.bf16.mxu0 0
  %290 = vmatmul.mubr.bf16.gmra.mrb[0].mxu0 %v186
  %v291 = vpop.f32.mrb[0].mxu0
  %v292 = vadd.f32 %v75, %v291
  %v293 = vpop.f32.mrb[0].mxu0
  %v294 = vpop.f32.mrb[0].mxu0
  %v295 = vadd.f32 %v75, %v294
  %v296 = vpop.f32.mrb[0].mxu0
  %297 = vmatprep.mubr.bf16.mxu0 0
  %298 = vmatmul.mubr.bf16.gmra.mrb[0].mxu0 %v189
  %v299 = vpop.f32.mrb[0].mxu0
  %v300 = vadd.f32 %v75, %v299
  %v301 = vpop.f32.mrb[0].mxu0
  %v302 = vpop.f32.mrb[0].mxu0
  %v303 = vadd.f32 %v75, %v302
  %v304 = vpop.f32.mrb[0].mxu0
  %305 = vmatprep.mubr.bf16.mxu0 0
  %306 = vmatmul.mubr.bf16.gmra.mrb[0].mxu0 %v192
  %v307 = vpop.f32.mrb[0].mxu0
  %v308 = vadd.f32 %v75, %v307
  %v309 = vpop.f32.mrb[0].mxu0
  %v310 = vpop.f32.mrb[0].mxu0
  %v311 = vadd.f32 %v75, %v310
  %v312 = vpop.f32.mrb[0].mxu0
  %313 = vmatprep.mubr.bf16.mxu0 0
  %314 = vmatmul.mubr.bf16.gmra.mrb[0].mxu0 %v195
  %v315 = vpop.f32.mrb[0].mxu0
  %v316 = vadd.f32 %v75, %v315
  %v317 = vpop.f32.mrb[0].mxu0
  %v318 = vpop.f32.mrb[0].mxu0
  %v319 = vadd.f32 %v75, %v318
  %v320 = vpop.f32.mrb[0].mxu0
  %321 = vmatprep.mubr.bf16.mxu0 0
  %322 = vmatmul.mubr.bf16.gmra.mrb[0].mxu0 %v198
  %v323 = vpop.f32.mrb[0].mxu0
  %v324 = vadd.f32 %v75, %v323
  %v325 = vpop.f32.mrb[0].mxu0
  %v326 = vpop.f32.mrb[0].mxu0
  %v327 = vadd.f32 %v75, %v326
  %v328 = vpop.f32.mrb[0].mxu0
  %329 = vmatprep.mubr.bf16.mxu0 0
  %330 = vmatmul.mubr.bf16.gmra.mrb[0].mxu0 %v201
  %v331 = vpop.f32.mrb[0].mxu0
  %v332 = vadd.f32 %v75, %v331
  %v333 = vpop.f32.mrb[0].mxu0
  %v334 = vpop.f32.mrb[0].mxu0
  %v335 = vadd.f32 %v75, %v334
  %v336 = vpop.f32.mrb[0].mxu0
  %337 = vmatprep.mubr.bf16.mxu0 0
  %338 = vmatmul.mubr.bf16.gmra.mrb[0].mxu0 %v204
  %v339 = vpop.f32.mrb[0].mxu0
  %v340 = vadd.f32 %v75, %v339
  %v341 = vpop.f32.mrb[0].mxu0
  %v342 = vpop.f32.mrb[0].mxu0
  %v343 = vadd.f32 %v75, %v342
  %v344 = vpop.f32.mrb[0].mxu0
  %345 = vmatprep.mubr.bf16.mxu0 0
  %346 = vmatmul.mubr.bf16.gmra.mrb[0].mxu0 %v207
  %v347 = vpop.f32.mrb[0].mxu0
  %v348 = vadd.f32 %v75, %v347
  %v349 = vpop.f32.mrb[0].mxu0
  %v350 = vpop.f32.mrb[0].mxu0
  %v351 = vadd.f32 %v75, %v350
  %v352 = vpop.f32.mrb[0].mxu0
  %353 = vmatprep.mubr.bf16.mxu0 0
  %354 = vmatmul.mubr.bf16.gmra.mrb[0].mxu0 %v210
  %v355 = vpop.f32.mrb[0].mxu0
  %v356 = vadd.f32 %v75, %v355
  %v357 = vpop.f32.mrb[0].mxu0
  %v358 = vpop.f32.mrb[0].mxu0
  %v359 = vadd.f32 %v75, %v358
  %v360 = vpop.f32.mrb[0].mxu0
  %361 = vmatprep.mubr.bf16.mxu0 0
  %362 = vmatmul.mubr.bf16.gmra.mrb[0].mxu0 %v213
  %v363 = vpop.f32.mrb[0].mxu0
  %v364 = vadd.f32 %v75, %v363
  %v365 = vpop.f32.mrb[0].mxu0
  %v366 = vpop.f32.mrb[0].mxu0
  %v367 = vadd.f32 %v75, %v366
  %v368 = vpop.f32.mrb[0].mxu0
  %369 = vmatprep.mubr.bf16.mxu0 0
  %370 = vmatmul.mubr.bf16.gmra.mrb[0].mxu0 %v216
  %v371 = vpop.f32.mrb[0].mxu0
  %v372 = vadd.f32 %v75, %v371
  %v373 = vpop.f32.mrb[0].mxu0
  %v374 = vpop.f32.mrb[0].mxu0
  %v375 = vadd.f32 %v75, %v374
  %v376 = vpop.f32.mrb[0].mxu0
  %377 = vmatprep.mubr.bf16.mxu0 0
  %378 = vmatmul.mubr.bf16.gmra.mrb[0].mxu0 %v219
  %v379 = vpop.f32.mrb[0].mxu0
  %v380 = vadd.f32 %v75, %v379
  %v381 = vpop.f32.mrb[0].mxu0
  %v382 = vpop.f32.mrb[0].mxu0
  %v383 = vadd.f32 %v75, %v382
  %v384 = vpop.f32.mrb[0].mxu0
  %385 = vdwg.mxu0
  %v386 = vmax.f32 %v260, 0.0
  %v387 = vmax.f32 %v263, 0.0
  %v388 = vmax.f32 %v268, 0.0
  %v389 = vmax.f32 %v271, 0.0
  %v390 = vmax.f32 %v276, 0.0
  %v391 = vmax.f32 %v279, 0.0
  %v392 = vmax.f32 %v284, 0.0
  %v393 = vmax.f32 %v287, 0.0
  %v394 = vmax.f32 %v292, 0.0
  %v395 = vmax.f32 %v295, 0.0
  %v396 = vmax.f32 %v300, 0.0
  %v397 = vmax.f32 %v303, 0.0
  %v398 = vmax.f32 %v308, 0.0
  %v399 = vmax.f32 %v311, 0.0
  %v400 = vmax.f32 %v316, 0.0
  %v401 = vmax.f32 %v319, 0.0
  %v402 = vmax.f32 %v324, 0.0
  %v403 = vmax.f32 %v327, 0.0
  %v404 = vmax.f32 %v332, 0.0
  %v405 = vmax.f32 %v335, 0.0
  %v406 = vmax.f32 %v340, 0.0
  %v407 = vmax.f32 %v343, 0.0
  %v408 = vmax.f32 %v348, 0.0
  %v409 = vmax.f32 %v351, 0.0
  %v410 = vmax.f32 %v356, 0.0
  %v411 = vmax.f32 %v359, 0.0
  %v412 = vmax.f32 %v364, 0.0
  %v413 = vmax.f32 %v367, 0.0
  %v414 = vmax.f32 %v372, 0.0
  %v415 = vmax.f32 %v375, 0.0
  %v416 = vmax.f32 %v380, 0.0
  %v417 = vmax.f32 %v383, 0.0
  %v418 = vpack.c.bf16 %v387, %v386
  %v419 = vpack.c.bf16 %v389, %v388
  %v420 = vpack.c.bf16 %v391, %v390
  %v421 = vpack.c.bf16 %v393, %v392
  %v422 = vpack.c.bf16 %v395, %v394
  %v423 = vpack.c.bf16 %v397, %v396
  %v424 = vpack.c.bf16 %v399, %v398
  %v425 = vpack.c.bf16 %v401, %v400
  %v426 = vpack.c.bf16 %v403, %v402
  %v427 = vpack.c.bf16 %v405, %v404
  %v428 = vpack.c.bf16 %v407, %v406
  %v429 = vpack.c.bf16 %v409, %v408
  %v430 = vpack.c.bf16 %v411, %v410
  %v431 = vpack.c.bf16 %v413, %v412
  %v432 = vpack.c.bf16 %v415, %v414
  %v433 = vpack.c.bf16 %v417, %v416
  %v434 = vld [vmem:[%s3] sm:$0xf]
  %v435 = vld [vmem:[%s3 + $0x4] sm:$0xf]
  %v436 = vld [vmem:[%s3 + $0x8] sm:$0xf]
  %v437 = vld [vmem:[%s3 + $0xc] sm:$0xf]
  %v438 = vld [vmem:[%s3 + $0x10] sm:$0xf]
  %v439 = vld [vmem:[%s3 + $0x14] sm:$0xf]
  %v440 = vld [vmem:[%s3 + $0x18] sm:$0xf]
  %v441 = vld [vmem:[%s3 + $0x1c] sm:$0xf]
  %v442 = vld [vmem:[%s3 + $0x20] sm:$0xf]
  %v443 = vld [vmem:[%s3 + $0x24] sm:$0xf]
  %v444 = vld [vmem:[%s3 + $0x28] sm:$0xf]
  %v445 = vld [vmem:[%s3 + $0x2c] sm:$0xf]
  %v446 = vld [vmem:[%s3 + $0x30] sm:$0xf]
  %v447 = vld [vmem:[%s3 + $0x34] sm:$0xf]
  %v448 = vld [vmem:[%s3 + $0x38] sm:$0xf]
  %v449 = vld [vmem:[%s3 + $0x3c] sm:$0xf]
  %v450 = vld [vmem:[%s4] sm:$0x1]
  %v452 = vlaneseq
  %v453 = vshrl.u32 %v452, 7
  %v454 = vsub.s32 0, %v453
  %v455 = vrot.slane %v450, %v454
  %v473 = vunpack.c.l.b16 %v434
  %v474 = vunpack.c.l.b16 %v435
  %v475 = vunpack.c.l.b16 %v436
  %v476 = vunpack.c.l.b16 %v437
  %v477 = vunpack.c.l.b16 %v438
  %v478 = vunpack.c.l.b16 %v439
  %v479 = vunpack.c.l.b16 %v440
  %v480 = vunpack.c.l.b16 %v441
  %v481 = vunpack.c.l.b16 %v442
  %v482 = vunpack.c.l.b16 %v443
  %v483 = vunpack.c.l.b16 %v444
  %v484 = vunpack.c.l.b16 %v445
  %v485 = vunpack.c.l.b16 %v446
  %v486 = vunpack.c.l.b16 %v447
  %v487 = vunpack.c.l.b16 %v448
  %v488 = vunpack.c.l.b16 %v449
  %v489 = vpack.c.b16 %v474, %v473
  %v490 = vpack.c.b16 %v476, %v475
  %v491 = vpack.c.b16 %v478, %v477
  %v492 = vpack.c.b16 %v480, %v479
  %v493 = vpack.c.b16 %v482, %v481
  %v494 = vpack.c.b16 %v484, %v483
  %v495 = vpack.c.b16 %v486, %v485
  %v496 = vpack.c.b16 %v488, %v487
  %505 = vmatprep.subr.bf16.mxu0 0
  %506 = vmatpush1.bf16.msra.mxu0 %v489
  %507 = vmatprep.subr.bf16.mxu0 0
  %508 = vmatpush1.bf16.msra.mxu0 %v490
  %509 = vmatprep.subr.bf16.mxu0 0
  %510 = vmatpush1.bf16.msra.mxu0 %v491
  %511 = vmatprep.subr.bf16.mxu0 0
  %512 = vmatpush1.bf16.msra.mxu0 %v492
  %513 = vmatprep.subr.bf16.mxu0 0
  %514 = vmatpush1.bf16.msra.mxu0 %v493
  %515 = vmatprep.subr.bf16.mxu0 0
  %516 = vmatpush1.bf16.msra.mxu0 %v494
  %517 = vmatprep.subr.bf16.mxu0 0
  %518 = vmatpush1.bf16.msra.mxu0 %v495
  %519 = vmatprep.subr.bf16.mxu0 0
  %520 = vmatpush1.bf16.msra.mxu0 %v496
  %521 = vmatprep.subr.bf16.mxu0 0
  %522 = vmatpush1.bf16.msra.mxu0 0
  %523 = vmatprep.subr.bf16.mxu0 0
  %524 = vmatpush1.bf16.msra.mxu0 0
  %525 = vmatprep.subr.bf16.mxu0 0
  %526 = vmatpush1.bf16.msra.mxu0 0
  %527 = vmatprep.subr.bf16.mxu0 0
  %528 = vmatpush1.bf16.msra.mxu0 0
  %529 = vmatprep.subr.bf16.mxu0 0
  %530 = vmatpush1.bf16.msra.mxu0 0
  %531 = vmatprep.subr.bf16.mxu0 0
  %532 = vmatpush1.bf16.msra.mxu0 0
  %533 = vmatprep.subr.bf16.mxu0 0
  %534 = vmatpush1.bf16.msra.mxu0 0
  %535 = vmatprep.subr.bf16.mxu0 0
  %536 = vmatpush1.bf16.msra.mxu0 0
  %537 = vmatprep.mubr.bf16.mxu0 0
  %538 = vmatmul.mubr.bf16.gmra.mrb[0].mxu0 %v418
  %v539 = vpop.f32.mrb[0].mxu0
  %v540 = vadd.f32 %v455, %v539
  %v541 = vpop.f32.mrb[0].mxu0
  %v542 = vpop.f32.mrb[0].mxu0
  %v543 = vadd.f32 %v455, %v542
  %v544 = vpop.f32.mrb[0].mxu0
  %545 = vmatprep.mubr.bf16.mxu0 0
  %546 = vmatmul.mubr.bf16.gmra.mrb[0].mxu0 %v419
  %v547 = vpop.f32.mrb[0].mxu0
  %v548 = vadd.f32 %v455, %v547
  %v549 = vpop.f32.mrb[0].mxu0
  %v550 = vpop.f32.mrb[0].mxu0
  %v551 = vadd.f32 %v455, %v550
  %v552 = vpop.f32.mrb[0].mxu0
  %553 = vmatprep.mubr.bf16.mxu0 0
  %554 = vmatmul.mubr.bf16.gmra.mrb[0].mxu0 %v420
  %v555 = vpop.f32.mrb[0].mxu0
  %v556 = vadd.f32 %v455, %v555
  %v557 = vpop.f32.mrb[0].mxu0
  %v558 = vpop.f32.mrb[0].mxu0
  %v559 = vadd.f32 %v455, %v558
  %v560 = vpop.f32.mrb[0].mxu0
  %561 = vmatprep.mubr.bf16.mxu0 0
  %562 = vmatmul.mubr.bf16.gmra.mrb[0].mxu0 %v421
  %v563 = vpop.f32.mrb[0].mxu0
  %v564 = vadd.f32 %v455, %v563
  %v565 = vpop.f32.mrb[0].mxu0
  %v566 = vpop.f32.mrb[0].mxu0
  %v567 = vadd.f32 %v455, %v566
  %v568 = vpop.f32.mrb[0].mxu0
  %569 = vmatprep.mubr.bf16.mxu0 0
  %570 = vmatmul.mubr.bf16.gmra.mrb[0].mxu0 %v422
  %v571 = vpop.f32.mrb[0].mxu0
  %v572 = vadd.f32 %v455, %v571
  %v573 = vpop.f32.mrb[0].mxu0
  %v574 = vpop.f32.mrb[0].mxu0
  %v575 = vadd.f32 %v455, %v574
  %v576 = vpop.f32.mrb[0].mxu0
  %577 = vmatprep.mubr.bf16.mxu0 0
  %578 = vmatmul.mubr.bf16.gmra.mrb[0].mxu0 %v423
  %v579 = vpop.f32.mrb[0].mxu0
  %v580 = vadd.f32 %v455, %v579
  %v581 = vpop.f32.mrb[0].mxu0
  %v582 = vpop.f32.mrb[0].mxu0
  %v583 = vadd.f32 %v455, %v582
  %v584 = vpop.f32.mrb[0].mxu0
  %585 = vmatprep.mubr.bf16.mxu0 0
  %586 = vmatmul.mubr.bf16.gmra.mrb[0].mxu0 %v424
  %v587 = vpop.f32.mrb[0].mxu0
  %v588 = vadd.f32 %v455, %v587
  %v589 = vpop.f32.mrb[0].mxu0
  %v590 = vpop.f32.mrb[0].mxu0
  %v591 = vadd.f32 %v455, %v590
  %v592 = vpop.f32.mrb[0].mxu0
  %593 = vmatprep.mubr.bf16.mxu0 0
  %594 = vmatmul.mubr.bf16.gmra.mrb[0].mxu0 %v425
  %v595 = vpop.f32.mrb[0].mxu0
  %v596 = vadd.f32 %v455, %v595
  %v597 = vpop.f32.mrb[0].mxu0
  %v598 = vpop.f32.mrb[0].mxu0
  %v599 = vadd.f32 %v455, %v598
  %v600 = vpop.f32.mrb[0].mxu0
  %601 = vmatprep.mubr.bf16.mxu0 0
  %602 = vmatmul.mubr.bf16.gmra.mrb[0].mxu0 %v426
  %v603 = vpop.f32.mrb[0].mxu0
  %v604 = vadd.f32 %v455, %v603
  %v605 = vpop.f32.mrb[0].mxu0
  %v606 = vpop.f32.mrb[0].mxu0
  %v607 = vadd.f32 %v455, %v606
  %v608 = vpop.f32.mrb[0].mxu0
  %609 = vmatprep.mubr.bf16.mxu0 0
  %610 = vmatmul.mubr.bf16.gmra.mrb[0].mxu0 %v427
  %v611 = vpop.f32.mrb[0].mxu0
  %v612 = vadd.f32 %v455, %v611
  %v613 = vpop.f32.mrb[0].mxu0
  %v614 = vpop.f32.mrb[0].mxu0
  %v615 = vadd.f32 %v455, %v614
  %v616 = vpop.f32.mrb[0].mxu0
  %617 = vmatprep.mubr.bf16.mxu0 0
  %618 = vmatmul.mubr.bf16.gmra.mrb[0].mxu0 %v428
  %v619 = vpop.f32.mrb[0].mxu0
  %v620 = vadd.f32 %v455, %v619
  %v621 = vpop.f32.mrb[0].mxu0
  %v622 = vpop.f32.mrb[0].mxu0
  %v623 = vadd.f32 %v455, %v622
  %v624 = vpop.f32.mrb[0].mxu0
  %625 = vmatprep.mubr.bf16.mxu0 0
  %626 = vmatmul.mubr.bf16.gmra.mrb[0].mxu0 %v429
  %v627 = vpop.f32.mrb[0].mxu0
  %v628 = vadd.f32 %v455, %v627
  %v629 = vpop.f32.mrb[0].mxu0
  %v630 = vpop.f32.mrb[0].mxu0
  %v631 = vadd.f32 %v455, %v630
  %v632 = vpop.f32.mrb[0].mxu0
  %633 = vmatprep.mubr.bf16.mxu0 0
  %634 = vmatmul.mubr.bf16.gmra.mrb[0].mxu0 %v430
  %v635 = vpop.f32.mrb[0].mxu0
  %v636 = vadd.f32 %v455, %v635
  %v637 = vpop.f32.mrb[0].mxu0
  %v638 = vpop.f32.mrb[0].mxu0
  %v639 = vadd.f32 %v455, %v638
  %v640 = vpop.f32.mrb[0].mxu0
  %641 = vmatprep.mubr.bf16.mxu0 0
  %642 = vmatmul.mubr.bf16.gmra.mrb[0].mxu0 %v431
  %v643 = vpop.f32.mrb[0].mxu0
  %v644 = vadd.f32 %v455, %v643
  %v645 = vpop.f32.mrb[0].mxu0
  %v646 = vpop.f32.mrb[0].mxu0
  %v647 = vadd.f32 %v455, %v646
  %v648 = vpop.f32.mrb[0].mxu0
  %649 = vmatprep.mubr.bf16.mxu0 0
  %650 = vmatmul.mubr.bf16.gmra.mrb[0].mxu0 %v432
  %v651 = vpop.f32.mrb[0].mxu0
  %v652 = vadd.f32 %v455, %v651
  %v653 = vpop.f32.mrb[0].mxu0
  %v654 = vpop.f32.mrb[0].mxu0
  %v655 = vadd.f32 %v455, %v654
  %v656 = vpop.f32.mrb[0].mxu0
  %657 = vmatprep.mubr.bf16.mxu0 0
  %658 = vmatmul.mubr.bf16.gmra.mrb[0].mxu0 %v433
  %v659 = vpop.f32.mrb[0].mxu0
  %v660 = vadd.f32 %v455, %v659
  %v661 = vpop.f32.mrb[0].mxu0
  %v662 = vpop.f32.mrb[0].mxu0
  %v663 = vadd.f32 %v455, %v662
  %v664 = vpop.f32.mrb[0].mxu0
  %665 = vdwg.mxu0
  %v666 = vmax.f32 %v540, 0.0
  %v667 = vmax.f32 %v543, 0.0
  %v668 = vmax.f32 %v548, 0.0
  %v669 = vmax.f32 %v551, 0.0
  %v670 = vmax.f32 %v556, 0.0
  %v671 = vmax.f32 %v559, 0.0
  %v672 = vmax.f32 %v564, 0.0
  %v673 = vmax.f32 %v567, 0.0
  %v674 = vmax.f32 %v572, 0.0
  %v675 = vmax.f32 %v575, 0.0
  %v676 = vmax.f32 %v580, 0.0
  %v677 = vmax.f32 %v583, 0.0
  %v678 = vmax.f32 %v588, 0.0
  %v679 = vmax.f32 %v591, 0.0
  %v680 = vmax.f32 %v596, 0.0
  %v681 = vmax.f32 %v599, 0.0
  %v682 = vmax.f32 %v604, 0.0
  %v683 = vmax.f32 %v607, 0.0
  %v684 = vmax.f32 %v612, 0.0
  %v685 = vmax.f32 %v615, 0.0
  %v686 = vmax.f32 %v620, 0.0
  %v687 = vmax.f32 %v623, 0.0
  %v688 = vmax.f32 %v628, 0.0
  %v689 = vmax.f32 %v631, 0.0
  %v690 = vmax.f32 %v636, 0.0
  %v691 = vmax.f32 %v639, 0.0
  %v692 = vmax.f32 %v644, 0.0
  %v693 = vmax.f32 %v647, 0.0
  %v694 = vmax.f32 %v652, 0.0
  %v695 = vmax.f32 %v655, 0.0
  %v696 = vmax.f32 %v660, 0.0
  %v697 = vmax.f32 %v663, 0.0
  %v698 = vpack.c.bf16 %v667, %v666
  %v699 = vpack.c.bf16 %v669, %v668
  %v700 = vpack.c.bf16 %v671, %v670
  %v701 = vpack.c.bf16 %v673, %v672
  %v702 = vpack.c.bf16 %v675, %v674
  %v703 = vpack.c.bf16 %v677, %v676
  %v704 = vpack.c.bf16 %v679, %v678
  %v705 = vpack.c.bf16 %v681, %v680
  %v706 = vpack.c.bf16 %v683, %v682
  %v707 = vpack.c.bf16 %v685, %v684
  %v708 = vpack.c.bf16 %v687, %v686
  %v709 = vpack.c.bf16 %v689, %v688
  %v710 = vpack.c.bf16 %v691, %v690
  %v711 = vpack.c.bf16 %v693, %v692
  %v712 = vpack.c.bf16 %v695, %v694
  %v713 = vpack.c.bf16 %v697, %v696
  %v714 = vld [vmem:[%s5] sm:$0xf]
  %v715 = vld [vmem:[%s5 + $0x4] sm:$0xf]
  %v716 = vld [vmem:[%s5 + $0x8] sm:$0xf]
  %v717 = vld [vmem:[%s5 + $0xc] sm:$0xf]
  %v718 = vld [vmem:[%s5 + $0x10] sm:$0xf]
  %v719 = vld [vmem:[%s5 + $0x14] sm:$0xf]
  %v720 = vld [vmem:[%s5 + $0x18] sm:$0xf]
  %v721 = vld [vmem:[%s5 + $0x1c] sm:$0xf]
  %v722 = vld [vmem:[%s5 + $0x20] sm:$0xf]
  %v723 = vld [vmem:[%s5 + $0x24] sm:$0xf]
  %v724 = vld [vmem:[%s5 + $0x28] sm:$0xf]
  %v725 = vld [vmem:[%s5 + $0x2c] sm:$0xf]
  %v726 = vld [vmem:[%s5 + $0x30] sm:$0xf]
  %v727 = vld [vmem:[%s5 + $0x34] sm:$0xf]
  %v728 = vld [vmem:[%s5 + $0x38] sm:$0xf]
  %v729 = vld [vmem:[%s5 + $0x3c] sm:$0xf]
  %v730 = vld [vmem:[%s6] sm:$0x1]
  %v732 = vlaneseq
  %v733 = vshrl.u32 %v732, 7
  %v734 = vsub.s32 0, %v733
  %v735 = vrot.slane %v730, %v734
  %v753 = vunpack.c.l.b16 %v714
  %v754 = vunpack.c.l.b16 %v715
  %v755 = vunpack.c.l.b16 %v716
  %v756 = vunpack.c.l.b16 %v717
  %v757 = vunpack.c.l.b16 %v718
  %v758 = vunpack.c.l.b16 %v719
  %v759 = vunpack.c.l.b16 %v720
  %v760 = vunpack.c.l.b16 %v721
  %v761 = vunpack.c.l.b16 %v722
  %v762 = vunpack.c.l.b16 %v723
  %v763 = vunpack.c.l.b16 %v724
  %v764 = vunpack.c.l.b16 %v725
  %v765 = vunpack.c.l.b16 %v726
  %v766 = vunpack.c.l.b16 %v727
  %v767 = vunpack.c.l.b16 %v728
  %v768 = vunpack.c.l.b16 %v729
  %v769 = vpack.c.b16 %v754, %v753
  %v770 = vpack.c.b16 %v756, %v755
  %v771 = vpack.c.b16 %v758, %v757
  %v772 = vpack.c.b16 %v760, %v759
  %v773 = vpack.c.b16 %v762, %v761
  %v774 = vpack.c.b16 %v764, %v763
  %v775 = vpack.c.b16 %v766, %v765
  %v776 = vpack.c.b16 %v768, %v767
  %785 = vmatprep.subr.bf16.mxu0 0
  %786 = vmatpush1.bf16.msra.mxu0 %v769
  %787 = vmatprep.subr.bf16.mxu0 0
  %788 = vmatpush1.bf16.msra.mxu0 %v770
  %789 = vmatprep.subr.bf16.mxu0 0
  %790 = vmatpush1.bf16.msra.mxu0 %v771
  %791 = vmatprep.subr.bf16.mxu0 0
  %792 = vmatpush1.bf16.msra.mxu0 %v772
  %793 = vmatprep.subr.bf16.mxu0 0
  %794 = vmatpush1.bf16.msra.mxu0 %v773
  %795 = vmatprep.subr.bf16.mxu0 0
  %796 = vmatpush1.bf16.msra.mxu0 %v774
  %797 = vmatprep.subr.bf16.mxu0 0
  %798 = vmatpush1.bf16.msra.mxu0 %v775
  %799 = vmatprep.subr.bf16.mxu0 0
  %800 = vmatpush1.bf16.msra.mxu0 %v776
  %801 = vmatprep.subr.bf16.mxu0 0
  %802 = vmatpush1.bf16.msra.mxu0 0
  %803 = vmatprep.subr.bf16.mxu0 0
  %804 = vmatpush1.bf16.msra.mxu0 0
  %805 = vmatprep.subr.bf16.mxu0 0
  %806 = vmatpush1.bf16.msra.mxu0 0
  %807 = vmatprep.subr.bf16.mxu0 0
  %808 = vmatpush1.bf16.msra.mxu0 0
  %809 = vmatprep.subr.bf16.mxu0 0
  %810 = vmatpush1.bf16.msra.mxu0 0
  %811 = vmatprep.subr.bf16.mxu0 0
  %812 = vmatpush1.bf16.msra.mxu0 0
  %813 = vmatprep.subr.bf16.mxu0 0
  %814 = vmatpush1.bf16.msra.mxu0 0
  %815 = vmatprep.subr.bf16.mxu0 0
  %816 = vmatpush1.bf16.msra.mxu0 0
  %817 = vmatprep.mubr.bf16.mxu0 0
  %818 = vmatmul.mubr.bf16.gmra.mrb[0].mxu0 %v698
  %v819 = vpop.f32.mrb[0].mxu0
  %v820 = vadd.f32 %v735, %v819
  %v821 = vpop.f32.mrb[0].mxu0
  %v822 = vpop.f32.mrb[0].mxu0
  %v823 = vadd.f32 %v735, %v822
  %v824 = vpop.f32.mrb[0].mxu0
  %825 = vmatprep.mubr.bf16.mxu0 0
  %826 = vmatmul.mubr.bf16.gmra.mrb[0].mxu0 %v699
  %v827 = vpop.f32.mrb[0].mxu0
  %v828 = vadd.f32 %v735, %v827
  %v829 = vpop.f32.mrb[0].mxu0
  %v830 = vpop.f32.mrb[0].mxu0
  %v831 = vadd.f32 %v735, %v830
  %v832 = vpop.f32.mrb[0].mxu0
  %833 = vmatprep.mubr.bf16.mxu0 0
  %834 = vmatmul.mubr.bf16.gmra.mrb[0].mxu0 %v700
  %v835 = vpop.f32.mrb[0].mxu0
  %v836 = vadd.f32 %v735, %v835
  %v837 = vpop.f32.mrb[0].mxu0
  %v838 = vpop.f32.mrb[0].mxu0
  %v839 = vadd.f32 %v735, %v838
  %v840 = vpop.f32.mrb[0].mxu0
  %841 = vmatprep.mubr.bf16.mxu0 0
  %842 = vmatmul.mubr.bf16.gmra.mrb[0].mxu0 %v701
  %v843 = vpop.f32.mrb[0].mxu0
  %v844 = vadd.f32 %v735, %v843
  %v845 = vpop.f32.mrb[0].mxu0
  %v846 = vpop.f32.mrb[0].mxu0
  %v847 = vadd.f32 %v735, %v846
  %v848 = vpop.f32.mrb[0].mxu0
  %849 = vmatprep.mubr.bf16.mxu0 0
  %850 = vmatmul.mubr.bf16.gmra.mrb[0].mxu0 %v702
  %v851 = vpop.f32.mrb[0].mxu0
  %v852 = vadd.f32 %v735, %v851
  %v853 = vpop.f32.mrb[0].mxu0
  %v854 = vpop.f32.mrb[0].mxu0
  %v855 = vadd.f32 %v735, %v854
  %v856 = vpop.f32.mrb[0].mxu0
  %857 = vmatprep.mubr.bf16.mxu0 0
  %858 = vmatmul.mubr.bf16.gmra.mrb[0].mxu0 %v703
  %v859 = vpop.f32.mrb[0].mxu0
  %v860 = vadd.f32 %v735, %v859
  %v861 = vpop.f32.mrb[0].mxu0
  %v862 = vpop.f32.mrb[0].mxu0
  %v863 = vadd.f32 %v735, %v862
  %v864 = vpop.f32.mrb[0].mxu0
  %865 = vmatprep.mubr.bf16.mxu0 0
  %866 = vmatmul.mubr.bf16.gmra.mrb[0].mxu0 %v704
  %v867 = vpop.f32.mrb[0].mxu0
  %v868 = vadd.f32 %v735, %v867
  %v869 = vpop.f32.mrb[0].mxu0
  %v870 = vpop.f32.mrb[0].mxu0
  %v871 = vadd.f32 %v735, %v870
  %v872 = vpop.f32.mrb[0].mxu0
  %873 = vmatprep.mubr.bf16.mxu0 0
  %874 = vmatmul.mubr.bf16.gmra.mrb[0].mxu0 %v705
  %v875 = vpop.f32.mrb[0].mxu0
  %v876 = vadd.f32 %v735, %v875
  %v877 = vpop.f32.mrb[0].mxu0
  %v878 = vpop.f32.mrb[0].mxu0
  %v879 = vadd.f32 %v735, %v878
  %v880 = vpop.f32.mrb[0].mxu0
  %881 = vmatprep.mubr.bf16.mxu0 0
  %882 = vmatmul.mubr.bf16.gmra.mrb[0].mxu0 %v706
  %v883 = vpop.f32.mrb[0].mxu0
  %v884 = vadd.f32 %v735, %v883
  %v885 = vpop.f32.mrb[0].mxu0
  %v886 = vpop.f32.mrb[0].mxu0
  %v887 = vadd.f32 %v735, %v886
  %v888 = vpop.f32.mrb[0].mxu0
  %889 = vmatprep.mubr.bf16.mxu0 0
  %890 = vmatmul.mubr.bf16.gmra.mrb[0].mxu0 %v707
  %v891 = vpop.f32.mrb[0].mxu0
  %v892 = vadd.f32 %v735, %v891
  %v893 = vpop.f32.mrb[0].mxu0
  %v894 = vpop.f32.mrb[0].mxu0
  %v895 = vadd.f32 %v735, %v894
  %v896 = vpop.f32.mrb[0].mxu0
  %897 = vmatprep.mubr.bf16.mxu0 0
  %898 = vmatmul.mubr.bf16.gmra.mrb[0].mxu0 %v708
  %v899 = vpop.f32.mrb[0].mxu0
  %v900 = vadd.f32 %v735, %v899
  %v901 = vpop.f32.mrb[0].mxu0
  %v902 = vpop.f32.mrb[0].mxu0
  %v903 = vadd.f32 %v735, %v902
  %v904 = vpop.f32.mrb[0].mxu0
  %905 = vmatprep.mubr.bf16.mxu0 0
  %906 = vmatmul.mubr.bf16.gmra.mrb[0].mxu0 %v709
  %v907 = vpop.f32.mrb[0].mxu0
  %v908 = vadd.f32 %v735, %v907
  %v909 = vpop.f32.mrb[0].mxu0
  %v910 = vpop.f32.mrb[0].mxu0
  %v911 = vadd.f32 %v735, %v910
  %v912 = vpop.f32.mrb[0].mxu0
  %913 = vmatprep.mubr.bf16.mxu0 0
  %914 = vmatmul.mubr.bf16.gmra.mrb[0].mxu0 %v710
  %v915 = vpop.f32.mrb[0].mxu0
  %v916 = vadd.f32 %v735, %v915
  %v917 = vpop.f32.mrb[0].mxu0
  %v918 = vpop.f32.mrb[0].mxu0
  %v919 = vadd.f32 %v735, %v918
  %v920 = vpop.f32.mrb[0].mxu0
  %921 = vmatprep.mubr.bf16.mxu0 0
  %922 = vmatmul.mubr.bf16.gmra.mrb[0].mxu0 %v711
  %v923 = vpop.f32.mrb[0].mxu0
  %v924 = vadd.f32 %v735, %v923
  %v925 = vpop.f32.mrb[0].mxu0
  %v926 = vpop.f32.mrb[0].mxu0
  %v927 = vadd.f32 %v735, %v926
  %v928 = vpop.f32.mrb[0].mxu0
  %929 = vmatprep.mubr.bf16.mxu0 0
  %930 = vmatmul.mubr.bf16.gmra.mrb[0].mxu0 %v712
  %v931 = vpop.f32.mrb[0].mxu0
  %v932 = vadd.f32 %v735, %v931
  %v933 = vpop.f32.mrb[0].mxu0
  %v934 = vpop.f32.mrb[0].mxu0
  %v935 = vadd.f32 %v735, %v934
  %v936 = vpop.f32.mrb[0].mxu0
  %937 = vmatprep.mubr.bf16.mxu0 0
  %938 = vmatmul.mubr.bf16.gmra.mrb[0].mxu0 %v713
  %v939 = vpop.f32.mrb[0].mxu0
  %v940 = vadd.f32 %v735, %v939
  %v941 = vpop.f32.mrb[0].mxu0
  %v942 = vpop.f32.mrb[0].mxu0
  %v943 = vadd.f32 %v735, %v942
  %v944 = vpop.f32.mrb[0].mxu0
  %945 = vdwg.mxu0
  %v946 = vmax.f32 %v820, 0.0
  %v947 = vmax.f32 %v823, 0.0
  %v948 = vmax.f32 %v828, 0.0
  %v949 = vmax.f32 %v831, 0.0
  %v950 = vmax.f32 %v836, 0.0
  %v951 = vmax.f32 %v839, 0.0
  %v952 = vmax.f32 %v844, 0.0
  %v953 = vmax.f32 %v847, 0.0
  %v954 = vmax.f32 %v852, 0.0
  %v955 = vmax.f32 %v855, 0.0
  %v956 = vmax.f32 %v860, 0.0
  %v957 = vmax.f32 %v863, 0.0
  %v958 = vmax.f32 %v868, 0.0
  %v959 = vmax.f32 %v871, 0.0
  %v960 = vmax.f32 %v876, 0.0
  %v961 = vmax.f32 %v879, 0.0
  %v962 = vmax.f32 %v884, 0.0
  %v963 = vmax.f32 %v887, 0.0
  %v964 = vmax.f32 %v892, 0.0
  %v965 = vmax.f32 %v895, 0.0
  %v966 = vmax.f32 %v900, 0.0
  %v967 = vmax.f32 %v903, 0.0
  %v968 = vmax.f32 %v908, 0.0
  %v969 = vmax.f32 %v911, 0.0
  %v970 = vmax.f32 %v916, 0.0
  %v971 = vmax.f32 %v919, 0.0
  %v972 = vmax.f32 %v924, 0.0
  %v973 = vmax.f32 %v927, 0.0
  %v974 = vmax.f32 %v932, 0.0
  %v975 = vmax.f32 %v935, 0.0
  %v976 = vmax.f32 %v940, 0.0
  %v977 = vmax.f32 %v943, 0.0
  %v978 = vpack.c.bf16 %v947, %v946
  %v979 = vpack.c.bf16 %v949, %v948
  %v980 = vpack.c.bf16 %v951, %v950
  %v981 = vpack.c.bf16 %v953, %v952
  %v982 = vpack.c.bf16 %v955, %v954
  %v983 = vpack.c.bf16 %v957, %v956
  %v984 = vpack.c.bf16 %v959, %v958
  %v985 = vpack.c.bf16 %v961, %v960
  %v986 = vpack.c.bf16 %v963, %v962
  %v987 = vpack.c.bf16 %v965, %v964
  %v988 = vpack.c.bf16 %v967, %v966
  %v989 = vpack.c.bf16 %v969, %v968
  %v990 = vpack.c.bf16 %v971, %v970
  %v991 = vpack.c.bf16 %v973, %v972
  %v992 = vpack.c.bf16 %v975, %v974
  %v993 = vpack.c.bf16 %v977, %v976
  %v994 = vld [vmem:[%s7] sm:$0xf]
  %v995 = vld [vmem:[%s7 + $0x4] sm:$0xf]
  %v996 = vld [vmem:[%s7 + $0x8] sm:$0xf]
  %v997 = vld [vmem:[%s7 + $0xc] sm:$0xf]
  %v998 = vld [vmem:[%s7 + $0x10] sm:$0xf]
  %v999 = vld [vmem:[%s7 + $0x14] sm:$0xf]
  %v1000 = vld [vmem:[%s7 + $0x18] sm:$0xf]
  %v1001 = vld [vmem:[%s7 + $0x1c] sm:$0xf]
  %v1002 = vld [vmem:[%s7 + $0x20] sm:$0xf]
  %v1003 = vld [vmem:[%s7 + $0x24] sm:$0xf]
  %v1004 = vld [vmem:[%s7 + $0x28] sm:$0xf]
  %v1005 = vld [vmem:[%s7 + $0x2c] sm:$0xf]
  %v1006 = vld [vmem:[%s7 + $0x30] sm:$0xf]
  %v1007 = vld [vmem:[%s7 + $0x34] sm:$0xf]
  %v1008 = vld [vmem:[%s7 + $0x38] sm:$0xf]
  %v1009 = vld [vmem:[%s7 + $0x3c] sm:$0xf]
  %v1010 = vld [vmem:[%s8] sm:$0x1]
  %v1012 = vlaneseq
  %v1013 = vshrl.u32 %v1012, 7
  %v1014 = vsub.s32 0, %v1013
  %v1015 = vrot.slane %v1010, %v1014
  %v1033 = vunpack.c.l.b16 %v994
  %v1034 = vunpack.c.l.b16 %v995
  %v1035 = vunpack.c.l.b16 %v996
  %v1036 = vunpack.c.l.b16 %v997
  %v1037 = vunpack.c.l.b16 %v998
  %v1038 = vunpack.c.l.b16 %v999
  %v1039 = vunpack.c.l.b16 %v1000
  %v1040 = vunpack.c.l.b16 %v1001
  %v1041 = vunpack.c.l.b16 %v1002
  %v1042 = vunpack.c.l.b16 %v1003
  %v1043 = vunpack.c.l.b16 %v1004
  %v1044 = vunpack.c.l.b16 %v1005
  %v1045 = vunpack.c.l.b16 %v1006
  %v1046 = vunpack.c.l.b16 %v1007
  %v1047 = vunpack.c.l.b16 %v1008
  %v1048 = vunpack.c.l.b16 %v1009
  %v1049 = vpack.c.b16 %v1034, %v1033
  %v1050 = vpack.c.b16 %v1036, %v1035
  %v1051 = vpack.c.b16 %v1038, %v1037
  %v1052 = vpack.c.b16 %v1040, %v1039
  %v1053 = vpack.c.b16 %v1042, %v1041
  %v1054 = vpack.c.b16 %v1044, %v1043
  %v1055 = vpack.c.b16 %v1046, %v1045
  %v1056 = vpack.c.b16 %v1048, %v1047
  %1065 = vmatprep.subr.bf16.mxu0 0
  %1066 = vmatpush1.bf16.msra.mxu0 %v1049
  %1067 = vmatprep.subr.bf16.mxu0 0
  %1068 = vmatpush1.bf16.msra.mxu0 %v1050
  %1069 = vmatprep.subr.bf16.mxu0 0
  %1070 = vmatpush1.bf16.msra.mxu0 %v1051
  %1071 = vmatprep.subr.bf16.mxu0 0
  %1072 = vmatpush1.bf16.msra.mxu0 %v1052
  %1073 = vmatprep.subr.bf16.mxu0 0
  %1074 = vmatpush1.bf16.msra.mxu0 %v1053
  %1075 = vmatprep.subr.bf16.mxu0 0
  %1076 = vmatpush1.bf16.msra.mxu0 %v1054
  %1077 = vmatprep.subr.bf16.mxu0 0
  %1078 = vmatpush1.bf16.msra.mxu0 %v1055
  %1079 = vmatprep.subr.bf16.mxu0 0
  %1080 = vmatpush1.bf16.msra.mxu0 %v1056
  %1081 = vmatprep.subr.bf16.mxu0 0
  %1082 = vmatpush1.bf16.msra.mxu0 0
  %1083 = vmatprep.subr.bf16.mxu0 0
  %1084 = vmatpush1.bf16.msra.mxu0 0
  %1085 = vmatprep.subr.bf16.mxu0 0
  %1086 = vmatpush1.bf16.msra.mxu0 0
  %1087 = vmatprep.subr.bf16.mxu0 0
  %1088 = vmatpush1.bf16.msra.mxu0 0
  %1089 = vmatprep.subr.bf16.mxu0 0
  %1090 = vmatpush1.bf16.msra.mxu0 0
  %1091 = vmatprep.subr.bf16.mxu0 0
  %1092 = vmatpush1.bf16.msra.mxu0 0
  %1093 = vmatprep.subr.bf16.mxu0 0
  %1094 = vmatpush1.bf16.msra.mxu0 0
  %1095 = vmatprep.subr.bf16.mxu0 0
  %1096 = vmatpush1.bf16.msra.mxu0 0
  %1097 = vmatprep.mubr.bf16.mxu0 0
  %1098 = vmatmul.mubr.bf16.gmra.mrb[0].mxu0 %v978
  %v1099 = vpop.f32.mrb[0].mxu0
  %v1100 = vadd.f32 %v1015, %v1099
  %v1101 = vpop.f32.mrb[0].mxu0
  %v1102 = vpop.f32.mrb[0].mxu0
  %v1103 = vadd.f32 %v1015, %v1102
  %v1104 = vpop.f32.mrb[0].mxu0
  %1105 = vmatprep.mubr.bf16.mxu0 0
  %1106 = vmatmul.mubr.bf16.gmra.mrb[0].mxu0 %v979
  %v1107 = vpop.f32.mrb[0].mxu0
  %v1108 = vadd.f32 %v1015, %v1107
  %v1109 = vpop.f32.mrb[0].mxu0
  %v1110 = vpop.f32.mrb[0].mxu0
  %v1111 = vadd.f32 %v1015, %v1110
  %v1112 = vpop.f32.mrb[0].mxu0
  %1113 = vmatprep.mubr.bf16.mxu0 0
  %1114 = vmatmul.mubr.bf16.gmra.mrb[0].mxu0 %v980
  %v1115 = vpop.f32.mrb[0].mxu0
  %v1116 = vadd.f32 %v1015, %v1115
  %v1117 = vpop.f32.mrb[0].mxu0
  %v1118 = vpop.f32.mrb[0].mxu0
  %v1119 = vadd.f32 %v1015, %v1118
  %v1120 = vpop.f32.mrb[0].mxu0
  %1121 = vmatprep.mubr.bf16.mxu0 0
  %1122 = vmatmul.mubr.bf16.gmra.mrb[0].mxu0 %v981
  %v1123 = vpop.f32.mrb[0].mxu0
  %v1124 = vadd.f32 %v1015, %v1123
  %v1125 = vpop.f32.mrb[0].mxu0
  %v1126 = vpop.f32.mrb[0].mxu0
  %v1127 = vadd.f32 %v1015, %v1126
  %v1128 = vpop.f32.mrb[0].mxu0
  %1129 = vmatprep.mubr.bf16.mxu0 0
  %1130 = vmatmul.mubr.bf16.gmra.mrb[0].mxu0 %v982
  %v1131 = vpop.f32.mrb[0].mxu0
  %v1132 = vadd.f32 %v1015, %v1131
  %v1133 = vpop.f32.mrb[0].mxu0
  %v1134 = vpop.f32.mrb[0].mxu0
  %v1135 = vadd.f32 %v1015, %v1134
  %v1136 = vpop.f32.mrb[0].mxu0
  %1137 = vmatprep.mubr.bf16.mxu0 0
  %1138 = vmatmul.mubr.bf16.gmra.mrb[0].mxu0 %v983
  %v1139 = vpop.f32.mrb[0].mxu0
  %v1140 = vadd.f32 %v1015, %v1139
  %v1141 = vpop.f32.mrb[0].mxu0
  %v1142 = vpop.f32.mrb[0].mxu0
  %v1143 = vadd.f32 %v1015, %v1142
  %v1144 = vpop.f32.mrb[0].mxu0
  %1145 = vmatprep.mubr.bf16.mxu0 0
  %1146 = vmatmul.mubr.bf16.gmra.mrb[0].mxu0 %v984
  %v1147 = vpop.f32.mrb[0].mxu0
  %v1148 = vadd.f32 %v1015, %v1147
  %v1149 = vpop.f32.mrb[0].mxu0
  %v1150 = vpop.f32.mrb[0].mxu0
  %v1151 = vadd.f32 %v1015, %v1150
  %v1152 = vpop.f32.mrb[0].mxu0
  %1153 = vmatprep.mubr.bf16.mxu0 0
  %1154 = vmatmul.mubr.bf16.gmra.mrb[0].mxu0 %v985
  %v1155 = vpop.f32.mrb[0].mxu0
  %v1156 = vadd.f32 %v1015, %v1155
  %v1157 = vpop.f32.mrb[0].mxu0
  %v1158 = vpop.f32.mrb[0].mxu0
  %v1159 = vadd.f32 %v1015, %v1158
  %v1160 = vpop.f32.mrb[0].mxu0
  %1161 = vmatprep.mubr.bf16.mxu0 0
  %1162 = vmatmul.mubr.bf16.gmra.mrb[0].mxu0 %v986
  %v1163 = vpop.f32.mrb[0].mxu0
  %v1164 = vadd.f32 %v1015, %v1163
  %v1165 = vpop.f32.mrb[0].mxu0
  %v1166 = vpop.f32.mrb[0].mxu0
  %v1167 = vadd.f32 %v1015, %v1166
  %v1168 = vpop.f32.mrb[0].mxu0
  %1169 = vmatprep.mubr.bf16.mxu0 0
  %1170 = vmatmul.mubr.bf16.gmra.mrb[0].mxu0 %v987
  %v1171 = vpop.f32.mrb[0].mxu0
  %v1172 = vadd.f32 %v1015, %v1171
  %v1173 = vpop.f32.mrb[0].mxu0
  %v1174 = vpop.f32.mrb[0].mxu0
  %v1175 = vadd.f32 %v1015, %v1174
  %v1176 = vpop.f32.mrb[0].mxu0
  %1177 = vmatprep.mubr.bf16.mxu0 0
  %1178 = vmatmul.mubr.bf16.gmra.mrb[0].mxu0 %v988
  %v1179 = vpop.f32.mrb[0].mxu0
  %v1180 = vadd.f32 %v1015, %v1179
  %v1181 = vpop.f32.mrb[0].mxu0
  %v1182 = vpop.f32.mrb[0].mxu0
  %v1183 = vadd.f32 %v1015, %v1182
  %v1184 = vpop.f32.mrb[0].mxu0
  %1185 = vmatprep.mubr.bf16.mxu0 0
  %1186 = vmatmul.mubr.bf16.gmra.mrb[0].mxu0 %v989
  %v1187 = vpop.f32.mrb[0].mxu0
  %v1188 = vadd.f32 %v1015, %v1187
  %v1189 = vpop.f32.mrb[0].mxu0
  %v1190 = vpop.f32.mrb[0].mxu0
  %v1191 = vadd.f32 %v1015, %v1190
  %v1192 = vpop.f32.mrb[0].mxu0
  %1193 = vmatprep.mubr.bf16.mxu0 0
  %1194 = vmatmul.mubr.bf16.gmra.mrb[0].mxu0 %v990
  %v1195 = vpop.f32.mrb[0].mxu0
  %v1196 = vadd.f32 %v1015, %v1195
  %v1197 = vpop.f32.mrb[0].mxu0
  %v1198 = vpop.f32.mrb[0].mxu0
  %v1199 = vadd.f32 %v1015, %v1198
  %v1200 = vpop.f32.mrb[0].mxu0
  %1201 = vmatprep.mubr.bf16.mxu0 0
  %1202 = vmatmul.mubr.bf16.gmra.mrb[0].mxu0 %v991
  %v1203 = vpop.f32.mrb[0].mxu0
  %v1204 = vadd.f32 %v1015, %v1203
  %v1205 = vpop.f32.mrb[0].mxu0
  %v1206 = vpop.f32.mrb[0].mxu0
  %v1207 = vadd.f32 %v1015, %v1206
  %v1208 = vpop.f32.mrb[0].mxu0
  %1209 = vmatprep.mubr.bf16.mxu0 0
  %1210 = vmatmul.mubr.bf16.gmra.mrb[0].mxu0 %v992
  %v1211 = vpop.f32.mrb[0].mxu0
  %v1212 = vadd.f32 %v1015, %v1211
  %v1213 = vpop.f32.mrb[0].mxu0
  %v1214 = vpop.f32.mrb[0].mxu0
  %v1215 = vadd.f32 %v1015, %v1214
  %v1216 = vpop.f32.mrb[0].mxu0
  %1217 = vmatprep.mubr.bf16.mxu0 0
  %1218 = vmatmul.mubr.bf16.gmra.mrb[0].mxu0 %v993
  %v1219 = vpop.f32.mrb[0].mxu0
  %v1220 = vadd.f32 %v1015, %v1219
  %v1221 = vpop.f32.mrb[0].mxu0
  %v1222 = vpop.f32.mrb[0].mxu0
  %v1223 = vadd.f32 %v1015, %v1222
  %v1224 = vpop.f32.mrb[0].mxu0
  %1225 = vdwg.mxu0
  %v1226 = vpack.c.bf16 %v1103, %v1100
  %v1227 = vpack.c.bf16 %v1111, %v1108
  %v1228 = vpack.c.bf16 %v1119, %v1116
  %v1229 = vpack.c.bf16 %v1127, %v1124
  %v1230 = vpack.c.bf16 %v1135, %v1132
  %v1231 = vpack.c.bf16 %v1143, %v1140
  %v1232 = vpack.c.bf16 %v1151, %v1148
  %v1233 = vpack.c.bf16 %v1159, %v1156
  %v1234 = vpack.c.bf16 %v1167, %v1164
  %v1235 = vpack.c.bf16 %v1175, %v1172
  %v1236 = vpack.c.bf16 %v1183, %v1180
  %v1237 = vpack.c.bf16 %v1191, %v1188
  %v1238 = vpack.c.bf16 %v1199, %v1196
  %v1239 = vpack.c.bf16 %v1207, %v1204
  %v1240 = vpack.c.bf16 %v1215, %v1212
  %v1241 = vpack.c.bf16 %v1223, %v1220
  %v1258 = vunpack.c.l.b16 %v1226
  %v1259 = vunpack.c.h.b16 %v1226
  %v1260 = vunpack.c.l.b16 %v1227
  %v1261 = vunpack.c.h.b16 %v1227
  %v1262 = vunpack.c.l.b16 %v1228
  %v1263 = vunpack.c.h.b16 %v1228
  %v1264 = vunpack.c.l.b16 %v1229
  %v1265 = vunpack.c.h.b16 %v1229
  %v1266 = vunpack.c.l.b16 %v1230
  %v1267 = vunpack.c.h.b16 %v1230
  %v1268 = vunpack.c.l.b16 %v1231
  %v1269 = vunpack.c.h.b16 %v1231
  %v1270 = vunpack.c.l.b16 %v1232
  %v1271 = vunpack.c.h.b16 %v1232
  %v1272 = vunpack.c.l.b16 %v1233
  %v1273 = vunpack.c.h.b16 %v1233
  %v1274 = vunpack.c.l.b16 %v1234
  %v1275 = vunpack.c.h.b16 %v1234
  %v1276 = vunpack.c.l.b16 %v1235
  %v1277 = vunpack.c.h.b16 %v1235
  %v1278 = vunpack.c.l.b16 %v1236
  %v1279 = vunpack.c.h.b16 %v1236
  %v1280 = vunpack.c.l.b16 %v1237
  %v1281 = vunpack.c.h.b16 %v1237
  %v1282 = vunpack.c.l.b16 %v1238
  %v1283 = vunpack.c.h.b16 %v1238
  %v1284 = vunpack.c.l.b16 %v1239
  %v1285 = vunpack.c.h.b16 %v1239
  %v1286 = vunpack.c.l.b16 %v1240
  %v1287 = vunpack.c.h.b16 %v1240
  %v1288 = vunpack.c.l.b16 %v1241
  %v1289 = vunpack.c.h.b16 %v1241
  %v1290 = vpack.c.b16 %v1258, %v1258
  %v1291 = vpack.c.b16 %v1259, %v1259
  %v1292 = vpack.c.b16 %v1260, %v1260
  %v1293 = vpack.c.b16 %v1261, %v1261
  %v1294 = vpack.c.b16 %v1262, %v1262
  %v1295 = vpack.c.b16 %v1263, %v1263
  %v1296 = vpack.c.b16 %v1264, %v1264
  %v1297 = vpack.c.b16 %v1265, %v1265
  %v1298 = vpack.c.b16 %v1266, %v1266
  %v1299 = vpack.c.b16 %v1267, %v1267
  %v1300 = vpack.c.b16 %v1268, %v1268
  %v1301 = vpack.c.b16 %v1269, %v1269
  %v1302 = vpack.c.b16 %v1270, %v1270
  %v1303 = vpack.c.b16 %v1271, %v1271
  %v1304 = vpack.c.b16 %v1272, %v1272
  %v1305 = vpack.c.b16 %v1273, %v1273
  %v1306 = vpack.c.b16 %v1274, %v1274
  %v1307 = vpack.c.b16 %v1275, %v1275
  %v1308 = vpack.c.b16 %v1276, %v1276
  %v1309 = vpack.c.b16 %v1277, %v1277
  %v1310 = vpack.c.b16 %v1278, %v1278
  %v1311 = vpack.c.b16 %v1279, %v1279
  %v1312 = vpack.c.b16 %v1280, %v1280
  %v1313 = vpack.c.b16 %v1281, %v1281
  %v1314 = vpack.c.b16 %v1282, %v1282
  %v1315 = vpack.c.b16 %v1283, %v1283
  %v1316 = vpack.c.b16 %v1284, %v1284
  %v1317 = vpack.c.b16 %v1285, %v1285
  %v1318 = vpack.c.b16 %v1286, %v1286
  %v1319 = vpack.c.b16 %v1287, %v1287
  %v1320 = vpack.c.b16 %v1288, %v1288
  %v1321 = vpack.c.b16 %v1289, %v1289
  %1354 = vst [vmem:[%s9] sm:$0xf] %v1290
  %1355 = vst [vmem:[%s9 + $0x4] sm:$0xf] %v1291
  %1356 = vst [vmem:[%s9 + $0x8] sm:$0xf] %v1292
  %1357 = vst [vmem:[%s9 + $0xc] sm:$0xf] %v1293
  %1358 = vst [vmem:[%s9 + $0x10] sm:$0xf] %v1294
  %1359 = vst [vmem:[%s9 + $0x14] sm:$0xf] %v1295
  %1360 = vst [vmem:[%s9 + $0x18] sm:$0xf] %v1296
  %1361 = vst [vmem:[%s9 + $0x1c] sm:$0xf] %v1297
  %1362 = vst [vmem:[%s9 + $0x20] sm:$0xf] %v1298
  %1363 = vst [vmem:[%s9 + $0x24] sm:$0xf] %v1299
  %1364 = vst [vmem:[%s9 + $0x28] sm:$0xf] %v1300
  %1365 = vst [vmem:[%s9 + $0x2c] sm:$0xf] %v1301
  %1366 = vst [vmem:[%s9 + $0x30] sm:$0xf] %v1302
  %1367 = vst [vmem:[%s9 + $0x34] sm:$0xf] %v1303
  %1368 = vst [vmem:[%s9 + $0x38] sm:$0xf] %v1304
  %1369 = vst [vmem:[%s9 + $0x3c] sm:$0xf] %v1305
  %1370 = vst [vmem:[%s9 + $0x40] sm:$0xf] %v1306
  %1371 = vst [vmem:[%s9 + $0x44] sm:$0xf] %v1307
  %1372 = vst [vmem:[%s9 + $0x48] sm:$0xf] %v1308
  %1373 = vst [vmem:[%s9 + $0x4c] sm:$0xf] %v1309
  %1374 = vst [vmem:[%s9 + $0x50] sm:$0xf] %v1310
  %1375 = vst [vmem:[%s9 + $0x54] sm:$0xf] %v1311
  %1376 = vst [vmem:[%s9 + $0x58] sm:$0xf] %v1312
  %1377 = vst [vmem:[%s9 + $0x5c] sm:$0xf] %v1313
  %1378 = vst [vmem:[%s9 + $0x60] sm:$0xf] %v1314
  %1379 = vst [vmem:[%s9 + $0x64] sm:$0xf] %v1315
  %1380 = vst [vmem:[%s9 + $0x68] sm:$0xf] %v1316
  %1381 = vst [vmem:[%s9 + $0x6c] sm:$0xf] %v1317
  %1382 = vst [vmem:[%s9 + $0x70] sm:$0xf] %v1318
  %1383 = vst [vmem:[%s9 + $0x74] sm:$0xf] %v1319
  %1384 = vst [vmem:[%s9 + $0x78] sm:$0xf] %v1320
  %1385 = vst [vmem:[%s9 + $0x7c] sm:$0xf] %v1321
  // Predicated region
  $region38: #{value_module_forward.1} parent=0 // pred_check
    _
  $region39: #{value_module_forward.1} parent=0 // pred_check_branch
    %1387 = sbr.rel (0) target = $region41
  $region40: #{value_module_forward.1} parent=0 // pred_region
    _
  $region41: #{value_module_forward.1} parent=0 // pred_fallthru
    _
  // Predicated region
  $region42: #{value_module_forward.1} parent=0 // pred_check
    _
  $region43: #{value_module_forward.1} parent=0 // pred_check_branch
    %1389 = sbr.rel (0) target = $region45
  $region44: #{value_module_forward.1} parent=0 // pred_region
    _
  $region45: #{value_module_forward.1} parent=0 // pred_fallthru
    _

</llo_original>
